<compile_context>
chip_gen: v5e
topology: v5e:2x2
jax: 0.10.0
libtpu: 0.0.40
codegen_flags: <defaults>
</compile_context>

<pallas_src>
import functools

import jax
import jax.numpy as jnp
from jax.experimental import pallas as pl
from jax.experimental.pallas import tpu as pltpu

_LANE = 128


# ----------------------------------------------------------------------------
# Fused kernel
# ----------------------------------------------------------------------------
def _apply_act(name, y):
    if name == "tanh":
        return jnp.tanh(y)
    if name == "relu":
        return jnp.maximum(y, 0.0)
    raise ValueError(f"unsupported activation: {name}")


def _fused_resnet_kernel(*refs, n_hidden, h, stable, act):
    """Whole Resnet forward in one kernel.

    Ref order:
      x, in_w, in_b, w_stack, (wu_stack if stable), b_all, out_w, out_b, o
    Weights are pre-transposed to [in, out] (plain x @ W, f32 accumulation)
    and stored in the "dot dtype" (bf16 by default); biases are f32.
    """
    x_ref, in_w_ref, in_b_ref, w_ref = refs[:4]
    if stable:
        wu_ref, b_ref, out_w_ref, out_b_ref, o_ref = refs[4:]
    else:
        b_ref, out_w_ref, out_b_ref, o_ref = refs[4:]

    dot_dt = in_w_ref.dtype
    x = x_ref[...].astype(dot_dt)

    out = _apply_act(
        act,
        jnp.dot(x, in_w_ref[...], preferred_element_type=jnp.float32)
        + in_b_ref[...])

    if stable:
        # One wide matmul replaces L tiny per-layer x@wu matmuls and takes them
        # off the serial out-dependency chain; biases (b + bu) already folded.
        add_src = (jnp.dot(x, wu_ref[...], preferred_element_type=jnp.float32)
                   + b_ref[...])                      # (tile_b, L*h), f32
    else:
        add_src = b_ref[...]                          # (1, L*h), f32

    def layer_step(i, out):
        y = jnp.dot(out.astype(dot_dt), w_ref[i],
                    preferred_element_type=jnp.float32)
        if isinstance(i, int):                        # static unroll: static slice
            y = y + add_src[:, i * h:(i + 1) * h]
        else:                                         # fori_loop: dynamic slice
            y = y + jax.lax.dynamic_slice_in_dim(add_src, i * h, h, axis=1)
        return _apply_act(act, y) + out               # residual

    if n_hidden <= 4:
        for i in range(n_hidden):                     # statically unrolled
            out = layer_step(i, out)
    else:
        # Deep nets: bound vreg live ranges instead of unrolling everything.
        out = jax.lax.fori_loop(0, n_hidden, layer_step, out)

    # Lane-dense (tile_b, 128*k) store; wrapper slices out the real columns.
    o_ref[...] = (jnp.dot(out.astype(dot_dt), out_w_ref[...],
                          preferred_element_type=jnp.float32)
                  + out_b_ref[...]).astype(o_ref.dtype)


# ----------------------------------------------------------------------------
# One-time parameter preprocessing (hoisted out of the forward hot path)
# ----------------------------------------------------------------------------
def _make_neg_A(w, epsilon):
    """-A where A = rescale(W^T W) + eps*I   (stable_forward preprocessing)."""
    hdim = w.shape[1]
    rtr = jnp.matmul(w.T, w, precision=jax.lax.Precision.HIGHEST)
    delta = 1.0 - 2.0 * epsilon
    norm = jnp.sqrt(jnp.sum(rtr * rtr))               # Frobenius norm
    rtr = jnp.where(norm > delta, (delta ** 0.5) * rtr / jnp.sqrt(norm), rtr)
    a = rtr + jnp.eye(hdim, dtype=jnp.float32) * epsilon
    return -a


def prepare_resnet_params(params, *, stable, epsilon=0.01,
                          dot_dtype=jnp.bfloat16):
    """Run once per parameter update: pre-transpose weights to [in, out],
    precompute -A for the stable path, fold/stack biases, stack per-layer
    weights into single arrays, and zero-pad the output projection to a
    lane-dense width."""
    h = params["input_w"].shape[0]                    # hidden width
    out_dim = params["output_w"].shape[0]
    pad = (-out_dim) % _LANE

    out_w = jnp.pad(params["output_w"].T, ((0, 0), (0, pad)))
    out_b = jnp.pad(params["output_b"].reshape(1, -1), ((0, 0), (0, pad)))

    ws, bs, wus = [], [], []
    for i, (w, b) in enumerate(params["hidden"]):
        assert w.shape == (h, h), "residual blocks require equal hidden widths"
        if stable:
            neg_a = _make_neg_A(w, epsilon)           # symmetric; .T == itself
            wu, bu = params["input_layers"][i]
            ws.append(neg_a.T)
            wus.append(wu.T)
            bs.append((b + bu).reshape(1, -1))
        else:
            ws.append(w.T)
            bs.append(b.reshape(1, -1))

    prep = {
        "input_w": params["input_w"].T.astype(dot_dtype),
        "input_b": params["input_b"].reshape(1, -1).astype(jnp.float32),
        "hidden_w": jnp.stack(ws).astype(dot_dtype),            # (L, h, h)
        "hidden_b": jnp.concatenate(bs, axis=1).astype(jnp.float32),  # (1, L*h)
        "output_w": out_w.astype(dot_dtype),                    # (h, pad128)
        "output_b": out_b.astype(jnp.float32),                  # (1, pad128)
    }
    if stable:
        prep["hidden_wu"] = jnp.concatenate(wus, axis=1).astype(dot_dtype)  # (d_in, L*h)
    return prep


# ----------------------------------------------------------------------------
# Forward (single fused pallas_call, jit-wrapped)
# ----------------------------------------------------------------------------
def _choose_block_b(batch):
    for cand in (1024, 512, 256, 128):
        if batch >= cand and batch % cand == 0:
            return cand
    return batch


@functools.partial(jax.jit, static_argnames=("stable", "activation", "out_dim"))
def resnet_forward(prepared, x, *, stable, activation, out_dim):
    batch, d_in = x.shape
    h = prepared["input_w"].shape[1]
    n_hidden = prepared["hidden_w"].shape[0]
    padded_out = prepared["output_w"].shape[1]

    block_b = _choose_block_b(batch)
    grid = (batch // block_b,)

    const2 = lambda i: (0, 0)
    const3 = lambda i: (0, 0, 0)

    inputs = [x, prepared["input_w"], prepared["input_b"], prepared["hidden_w"]]
    in_specs = [
        pl.BlockSpec((block_b, d_in), lambda i: (i, 0)),
        pl.BlockSpec(prepared["input_w"].shape, const2),
        pl.BlockSpec(prepared["input_b"].shape, const2),
        pl.BlockSpec(prepared["hidden_w"].shape, const3),
    ]
    if stable:
        inputs.append(prepared["hidden_wu"])
        in_specs.append(pl.BlockSpec(prepared["hidden_wu"].shape, const2))
    for name in ("hidden_b", "output_w", "output_b"):
        inputs.append(prepared[name])
        in_specs.append(pl.BlockSpec(prepared[name].shape, const2))

    kernel = functools.partial(
        _fused_resnet_kernel, n_hidden=n_hidden, h=h, stable=stable,
        act=activation)

    out_padded = pl.pallas_call(
        kernel,
        out_shape=jax.ShapeDtypeStruct((batch, padded_out), jnp.float32),
        grid=grid,
        in_specs=in_specs,
        out_specs=pl.BlockSpec((block_b, padded_out), lambda i: (i, 0)),
        compiler_params=pltpu.CompilerParams(
            dimension_semantics=("parallel",)),
    )(*inputs)
    return out_padded[:, :out_dim]


# ----------------------------------------------------------------------------
# Pure-JAX reference (correctness check only)
# ----------------------------------------------------------------------------
def _ref_linear(x, w, b):
    return jnp.matmul(x, w.T, precision=jax.lax.Precision.HIGHEST) + b


def resnet_reference(params, x, *, stable, activation, epsilon=0.01):
    act = lambda y: _apply_act(activation, y)
    out = act(_ref_linear(x, params["input_w"], params["input_b"]))
    u = x
    for i, (w, b) in enumerate(params["hidden"]):
        shortcut = out
        if stable:
            rtr = jnp.matmul(w.T, w, precision=jax.lax.Precision.HIGHEST)
            delta = 1.0 - 2.0 * epsilon
            norm = jnp.sqrt(jnp.sum(rtr * rtr))
            rtr = jnp.where(norm > delta, (delta ** 0.5) * rtr / jnp.sqrt(norm), rtr)
            a = rtr + jnp.eye(rtr.shape[0], dtype=jnp.float32) * epsilon
            out = _ref_linear(out, -a, b)
            wu, bu = params["input_layers"][i]
            out = out + _ref_linear(u, wu, bu)
        else:
            out = _ref_linear(out, w, b)
        out = act(out) + shortcut
    return _ref_linear(out, params["output_w"], params["output_b"])


# ----------------------------------------------------------------------------
# Deterministic parameter init (PyTorch-Linear-style uniform bounds)
# ----------------------------------------------------------------------------
def _init_linear(key, in_dim, out_dim):
    kw, kb = jax.random.split(key)
    bound = 1.0 / (in_dim ** 0.5)
    w = jax.random.uniform(kw, (out_dim, in_dim), jnp.float32, -bound, bound)
    b = jax.random.uniform(kb, (out_dim,), jnp.float32, -bound, bound)
    return w, b


def init_resnet_params(key, layers, stable):
    keys = jax.random.split(key, 2 * len(layers) + 4)
    ki = iter(keys)
    params = {}
    params["input_w"], params["input_b"] = _init_linear(next(ki), layers[0], layers[1])
    params["hidden"] = [
        _init_linear(next(ki), layers[i], layers[i + 1])
        for i in range(1, len(layers) - 2)
    ]
    params["output_w"], params["output_b"] = _init_linear(next(ki), layers[-2], layers[-1])
    if stable:
        params["input_layers"] = [
            _init_linear(next(ki), layers[0], layers[i])
            for i in range(1, len(layers) - 1)
        ]
    return params


# ----------------------------------------------------------------------------
if __name__ == "__main__":
    layers = [4, 32, 32, 32, 1]   # [d_in, hidden, hidden, hidden, d_out]
    batch = 8

    key = jax.random.PRNGKey(0)
    kp, kx = jax.random.split(key)
    x = jax.random.normal(kx, (batch, layers[0]), dtype=jnp.float32)

    for stable, activation in ((True, "tanh"), (False, "relu")):
        params = init_resnet_params(kp, layers, stable)
        ref = resnet_reference(params, x, stable=stable, activation=activation)

        for dot_dtype, tol in ((jnp.bfloat16, 5e-2), (jnp.float32, 1e-2)):
            prepared = prepare_resnet_params(params, stable=stable,
                                             dot_dtype=dot_dtype)  # once per update
            out = resnet_forward(prepared, x, stable=stable,
                                 activation=activation, out_dim=layers[-1])
            out = jax.block_until_ready(out)
            assert out.shape == (batch, layers[-1])
            err = float(jnp.max(jnp.abs(out - ref)))
            assert err < tol, (
                f"Pallas mismatch (stable={stable}, dtype={dot_dtype}, err={err})")

    print("KERNEL_OK")
</pallas_src>

<mosaic_0001>
module attributes {stable_mosaic.version = 11 : i64} {
  func.func @_fused_resnet_kernel(%arg0: i32, %arg1: memref<8x4xf32, #tpu.memory_space<vmem>>, %arg2: memref<4x32xbf16, #tpu.memory_space<vmem>>, %arg3: memref<1x32xf32, #tpu.memory_space<vmem>>, %arg4: memref<2x32x32xbf16, #tpu.memory_space<vmem>>, %arg5: memref<4x64xbf16, #tpu.memory_space<vmem>>, %arg6: memref<1x64xf32, #tpu.memory_space<vmem>>, %arg7: memref<32x128xbf16, #tpu.memory_space<vmem>>, %arg8: memref<1x128xf32, #tpu.memory_space<vmem>>, %arg9: memref<8x128xf32, #tpu.memory_space<vmem>>) attributes {dimension_semantics = [#tpu.dimension_semantics<parallel>], iteration_bounds = array<i64: 1>, scalar_prefetch = 0 : i64, scratch_operands = 0 : i64, tpu.core_type = #tpu.core_type<tc>, window_params = [{transform_indices = @transform_0, window_bounds = array<i64: 8, 4>}, {pipeline_mode = #tpu.pipeline_mode<synchronous>, transform_indices = @transform_1, window_bounds = array<i64: 4, 32>}, {pipeline_mode = #tpu.pipeline_mode<synchronous>, transform_indices = @transform_2, window_bounds = array<i64: 1, 32>}, {pipeline_mode = #tpu.pipeline_mode<synchronous>, transform_indices = @transform_3, window_bounds = array<i64: 2, 32, 32>}, {pipeline_mode = #tpu.pipeline_mode<synchronous>, transform_indices = @transform_4, window_bounds = array<i64: 4, 64>}, {pipeline_mode = #tpu.pipeline_mode<synchronous>, transform_indices = @transform_5, window_bounds = array<i64: 1, 64>}, {pipeline_mode = #tpu.pipeline_mode<synchronous>, transform_indices = @transform_6, window_bounds = array<i64: 32, 128>}, {pipeline_mode = #tpu.pipeline_mode<synchronous>, transform_indices = @transform_7, window_bounds = array<i64: 1, 128>}, {transform_indices = @transform_8, window_bounds = array<i64: 8, 128>}]} {
    %c0 = arith.constant 0 : index
    %c0_0 = arith.constant 0 : index
    %0 = vector.load %arg1[%c0, %c0_0] : memref<8x4xf32, #tpu.memory_space<vmem>>, vector<8x4xf32>
    %1 = arith.truncf %0 : vector<8x4xf32> to vector<8x4xbf16>
    %c0_1 = arith.constant 0 : index
    %c0_2 = arith.constant 0 : index
    %2 = vector.load %arg2[%c0_1, %c0_2] : memref<4x32xbf16, #tpu.memory_space<vmem>>, vector<4x32xbf16>
    %cst = arith.constant dense<0.000000e+00> : vector<8x32xf32>
    %3 = tpu.matmul %1, %2, %cst {dimension_numbers = #tpu.dot_dimension_numbers<[1], [0], [0], [1], [0, 0, 1, 1], [], []>} : vector<8x4xbf16>, vector<4x32xbf16>, vector<8x32xf32> -> vector<8x32xf32>
    %c0_3 = arith.constant 0 : index
    %c0_4 = arith.constant 0 : index
    %4 = vector.load %arg3[%c0_3, %c0_4] : memref<1x32xf32, #tpu.memory_space<vmem>>, vector<1x32xf32>
    %5 = vector.broadcast %4 : vector<1x32xf32> to vector<8x32xf32>
    %6 = arith.addf %3, %5 : vector<8x32xf32>
    %7 = math.tanh %6 : vector<8x32xf32>
    %c0_5 = arith.constant 0 : index
    %c0_6 = arith.constant 0 : index
    %8 = vector.load %arg5[%c0_5, %c0_6] : memref<4x64xbf16, #tpu.memory_space<vmem>>, vector<4x64xbf16>
    %cst_7 = arith.constant dense<0.000000e+00> : vector<8x64xf32>
    %9 = tpu.matmul %1, %8, %cst_7 {dimension_numbers = #tpu.dot_dimension_numbers<[1], [0], [0], [1], [0, 0, 1, 1], [], []>} : vector<8x4xbf16>, vector<4x64xbf16>, vector<8x64xf32> -> vector<8x64xf32>
    %c0_8 = arith.constant 0 : index
    %c0_9 = arith.constant 0 : index
    %10 = vector.load %arg6[%c0_8, %c0_9] : memref<1x64xf32, #tpu.memory_space<vmem>>, vector<1x64xf32>
    %11 = vector.broadcast %10 : vector<1x64xf32> to vector<8x64xf32>
    %12 = arith.addf %9, %11 : vector<8x64xf32>
    %13 = arith.truncf %7 : vector<8x32xf32> to vector<8x32xbf16>
    %c0_10 = arith.constant 0 : index
    %c0_11 = arith.constant 0 : index
    %c0_12 = arith.constant 0 : index
    %14 = vector.load %arg4[%c0_10, %c0_11, %c0_12] : memref<2x32x32xbf16, #tpu.memory_space<vmem>>, vector<1x32x32xbf16>
    %15 = vector.shape_cast %14 : vector<1x32x32xbf16> to vector<32x32xbf16>
    %cst_13 = arith.constant dense<0.000000e+00> : vector<8x32xf32>
    %16 = tpu.matmul %13, %15, %cst_13 {dimension_numbers = #tpu.dot_dimension_numbers<[1], [0], [0], [1], [0, 0, 1, 1], [], []>} : vector<8x32xbf16>, vector<32x32xbf16>, vector<8x32xf32> -> vector<8x32xf32>
    %17 = vector.extract_strided_slice %12 {offsets = [0, 0], sizes = [8, 32], strides = [1, 1]} : vector<8x64xf32> to vector<8x32xf32>
    %18 = arith.addf %16, %17 : vector<8x32xf32>
    %19 = math.tanh %18 : vector<8x32xf32>
    %20 = arith.addf %19, %7 : vector<8x32xf32>
    %21 = arith.truncf %20 : vector<8x32xf32> to vector<8x32xbf16>
    %c1 = arith.constant 1 : index
    %c0_14 = arith.constant 0 : index
    %c0_15 = arith.constant 0 : index
    %22 = vector.load %arg4[%c1, %c0_14, %c0_15] : memref<2x32x32xbf16, #tpu.memory_space<vmem>>, vector<1x32x32xbf16>
    %23 = vector.shape_cast %22 : vector<1x32x32xbf16> to vector<32x32xbf16>
    %cst_16 = arith.constant dense<0.000000e+00> : vector<8x32xf32>
    %24 = tpu.matmul %21, %23, %cst_16 {dimension_numbers = #tpu.dot_dimension_numbers<[1], [0], [0], [1], [0, 0, 1, 1], [], []>} : vector<8x32xbf16>, vector<32x32xbf16>, vector<8x32xf32> -> vector<8x32xf32>
    %25 = vector.extract_strided_slice %12 {offsets = [0, 32], sizes = [8, 32], strides = [1, 1]} : vector<8x64xf32> to vector<8x32xf32>
    %26 = arith.addf %24, %25 : vector<8x32xf32>
    %27 = math.tanh %26 : vector<8x32xf32>
    %28 = arith.addf %27, %20 : vector<8x32xf32>
    %29 = arith.truncf %28 : vector<8x32xf32> to vector<8x32xbf16>
    %c0_17 = arith.constant 0 : index
    %c0_18 = arith.constant 0 : index
    %30 = vector.load %arg7[%c0_17, %c0_18] : memref<32x128xbf16, #tpu.memory_space<vmem>>, vector<32x128xbf16>
    %cst_19 = arith.constant dense<0.000000e+00> : vector<8x128xf32>
    %31 = tpu.matmul %29, %30, %cst_19 {dimension_numbers = #tpu.dot_dimension_numbers<[1], [0], [0], [1], [0, 0, 1, 1], [], []>} : vector<8x32xbf16>, vector<32x128xbf16>, vector<8x128xf32> -> vector<8x128xf32>
    %c0_20 = arith.constant 0 : index
    %c0_21 = arith.constant 0 : index
    %32 = vector.load %arg8[%c0_20, %c0_21] : memref<1x128xf32, #tpu.memory_space<vmem>>, vector<1x128xf32>
    %33 = vector.broadcast %32 : vector<1x128xf32> to vector<8x128xf32>
    %34 = arith.addf %31, %33 : vector<8x128xf32>
    %c0_22 = arith.constant 0 : index
    %c0_23 = arith.constant 0 : index
    %35 = vector.load %arg9[%c0_22, %c0_23] : memref<8x128xf32, #tpu.memory_space<vmem>>, vector<8x128xf32>
    tpu.vector_store %arg9[%c0_22, %c0_23], %34 {strides = array<i32>} : memref<8x128xf32, #tpu.memory_space<vmem>>, vector<8x128xf32>,
    return
  }
  func.func @transform_0(%arg0: i32) -> (i32, i32) {
    %c0_i32 = arith.constant 0 : i32
    %c0_i32_0 = arith.constant 0 : i32
    return %arg0, %c0_i32 : i32, i32
  }
  func.func @transform_1(%arg0: i32) -> (i32, i32) {
    %c0_i32 = arith.constant 0 : i32
    %c0_i32_0 = arith.constant 0 : i32
    %c0_i32_1 = arith.constant 0 : i32
    return %c0_i32, %c0_i32_0 : i32, i32
  }
  func.func @transform_2(%arg0: i32) -> (i32, i32) {
    %c0_i32 = arith.constant 0 : i32
    %c0_i32_0 = arith.constant 0 : i32
    %c0_i32_1 = arith.constant 0 : i32
    return %c0_i32, %c0_i32_0 : i32, i32
  }
  func.func @transform_3(%arg0: i32) -> (i32, i32, i32) {
    %c0_i32 = arith.constant 0 : i32
    %c0_i32_0 = arith.constant 0 : i32
    %c0_i32_1 = arith.constant 0 : i32
    %c0_i32_2 = arith.constant 0 : i32
    return %c0_i32, %c0_i32_0, %c0_i32_1 : i32, i32, i32
  }
  func.func @transform_4(%arg0: i32) -> (i32, i32) {
    %c0_i32 = arith.constant 0 : i32
    %c0_i32_0 = arith.constant 0 : i32
    %c0_i32_1 = arith.constant 0 : i32
    return %c0_i32, %c0_i32_0 : i32, i32
  }
  func.func @transform_5(%arg0: i32) -> (i32, i32) {
    %c0_i32 = arith.constant 0 : i32
    %c0_i32_0 = arith.constant 0 : i32
    %c0_i32_1 = arith.constant 0 : i32
    return %c0_i32, %c0_i32_0 : i32, i32
  }
  func.func @transform_6(%arg0: i32) -> (i32, i32) {
    %c0_i32 = arith.constant 0 : i32
    %c0_i32_0 = arith.constant 0 : i32
    %c0_i32_1 = arith.constant 0 : i32
    return %c0_i32, %c0_i32_0 : i32, i32
  }
  func.func @transform_7(%arg0: i32) -> (i32, i32) {
    %c0_i32 = arith.constant 0 : i32
    %c0_i32_0 = arith.constant 0 : i32
    %c0_i32_1 = arith.constant 0 : i32
    return %c0_i32, %c0_i32_0 : i32, i32
  }
  func.func @transform_8(%arg0: i32) -> (i32, i32) {
    %c0_i32 = arith.constant 0 : i32
    %c0_i32_0 = arith.constant 0 : i32
    return %arg0, %c0_i32 : i32, i32
  }
}

</mosaic_0001>

<llo_original>
// kernel: resnet_forward.1
$region0: #{resnet_forward.1}
  #allocation0 [shape = 'u32[]', space=smem, size = 0x4, offset = 0x4, fixed_abs, tag = 'smem constant byte address 0x4 - core index']
  #allocation1 [shape = 'u32[72,128]{1,0:T(1,128)}', space=vmem, size = 0x9000, scoped, tag = 'internal scratch']
  %s0 = inlined_call_operand.vmem [shape: f32[8,4], index: 0, kind: input, shape index: {}]
  %s1 = inlined_call_operand.vmem [shape: bf16[4,32], index: 1, kind: input, shape index: {}]
  %s2 = inlined_call_operand.vmem [shape: f32[1,32], index: 2, kind: input, shape index: {}]
  %s3 = inlined_call_operand.hbm [shape: bf16[2,32,32], index: 3, kind: input, shape index: {}]
  %s4 = inlined_call_operand.vmem [shape: bf16[4,64], index: 4, kind: input, shape index: {}]
  %s5 = inlined_call_operand.vmem [shape: f32[1,64], index: 5, kind: input, shape index: {}]
  %s6 = inlined_call_operand.hbm [shape: bf16[32,128], index: 6, kind: input, shape index: {}]
  %s7 = inlined_call_operand.vmem [shape: f32[1,128], index: 7, kind: input, shape index: {}]
  %s8 = inlined_call_operand.vmem [shape: f32[8,128], index: 8, kind: output, shape index: {}]
  %s9 = sld [smem:[#allocation0]]
  $region50: #{resnet_forward.1} parent=0
    _
  %s11 = ssub.s32 1, %s9
  %s12 = scalar_select 0, %s11, %s9
  $region1: #{resnet_forward.1} parent=0
    #allocation2 [shape = 'u8[16384]{0}', space=vmem, size = 0x4000, scoped, tag = 'input window, operand 3, single buffered']
    #allocation3 [shape = 's32[1]{0}', space=sflag, size = 0x4, scoped, tag = 'scoped memory for resnet_forward.1']
    #allocation4 [shape = 'u8[8192]{0}', space=vmem, size = 0x2000, scoped, tag = 'input window, operand 6, single buffered']
    #allocation5 [shape = 's32[1]{0}', space=sflag, size = 0x4, scoped, tag = 'scoped memory for resnet_forward.1']
    %13 = vsyncpa [#allocation3], 0
    %14 = vsyncpa [#allocation5], 0
    // Predicated region
    $region2: #{resnet_forward.1} parent=1 // pred_check
      _
    $region3: #{resnet_forward.1} parent=1 // pred_check_branch
      %16 = sbr.rel (0) target = $region5
    $region4: #{resnet_forward.1} parent=1 // pred_region
      _
    $region5: #{resnet_forward.1} parent=1 // pred_fallthru
      _
    // Predicated region
    $region6: #{resnet_forward.1} parent=1 // pred_check
      _
    $region7: #{resnet_forward.1} parent=1 // pred_check_branch
      %18 = sbr.rel (0) target = $region9
    $region8: #{resnet_forward.1} parent=1 // pred_region
      _
    $region9: #{resnet_forward.1} parent=1 // pred_fallthru
      _
    // Predicated region
    $region10: #{resnet_forward.1} parent=1 // pred_check
      _
    $region11: #{resnet_forward.1} parent=1 // pred_check_branch
      %20 = sbr.rel (0) target = $region13
    $region12: #{resnet_forward.1} parent=1 // pred_region
      _
    $region13: #{resnet_forward.1} parent=1 // pred_fallthru
      _
    // Predicated region
    $region14: #{resnet_forward.1} parent=1 // pred_check
      _
    $region15: #{resnet_forward.1} parent=1 // pred_check_branch
      %22 = sbr.rel (0) target = $region17
    $region16: #{resnet_forward.1} parent=1 // pred_region
      %24 = vsyncadd [#allocation3], 0
      %s25 = sshll.u32 %s3, 4
      %s26 = int_to_ptr.hbm [resolvable:$true] %s25
      %s27 = sshll.u32 [#allocation2], 4
      %s28 = int_to_ptr.vmem [resolvable:$true] %s27
      %33 = dma.hbm_to_vmem [thread:$0]  %s26, 512, %s28, [#allocation3], 64, 64, 4
    $region17: #{resnet_forward.1} parent=1 // pred_fallthru
      _
    // Predicated region
    $region18: #{resnet_forward.1} parent=1 // pred_check
      _
    $region19: #{resnet_forward.1} parent=1 // pred_check_branch
      %35 = sbr.rel (0) target = $region21
    $region20: #{resnet_forward.1} parent=1 // pred_region
      _
    $region21: #{resnet_forward.1} parent=1 // pred_fallthru
      _
    // Predicated region
    $region22: #{resnet_forward.1} parent=1 // pred_check
      _
    $region23: #{resnet_forward.1} parent=1 // pred_check_branch
      %37 = sbr.rel (0) target = $region25
    $region24: #{resnet_forward.1} parent=1 // pred_region
      _
    $region25: #{resnet_forward.1} parent=1 // pred_fallthru
      _
    // Predicated region
    $region26: #{resnet_forward.1} parent=1 // pred_check
      _
    $region27: #{resnet_forward.1} parent=1 // pred_check_branch
      %39 = sbr.rel (0) target = $region29
    $region28: #{resnet_forward.1} parent=1 // pred_region
      %41 = vsyncadd [#allocation5], 0
      %s42 = sshll.u32 %s6, 4
      %s43 = int_to_ptr.hbm [resolvable:$true] %s42
      %s44 = sshll.u32 [#allocation4], 4
      %s45 = int_to_ptr.vmem [resolvable:$true] %s44
      %50 = dma.hbm_to_vmem [thread:$0]  %s43, 256, %s45, [#allocation5], 64, 64, 4
    $region29: #{resnet_forward.1} parent=1 // pred_fallthru
      _
    // Predicated region
    $region30: #{resnet_forward.1} parent=1 // pred_check
      _
    $region31: #{resnet_forward.1} parent=1 // pred_check_branch
      %52 = sbr.rel (0) target = $region33
    $region32: #{resnet_forward.1} parent=1 // pred_region
      _
    $region33: #{resnet_forward.1} parent=1 // pred_fallthru
      _
    // Predicated region
    $region34: #{resnet_forward.1} parent=1 // pred_check
      _
    $region35: #{resnet_forward.1} parent=1 // pred_check_branch
      %54 = sbr.rel (0) target = $region37
    $region36: #{resnet_forward.1} parent=1 // pred_region
      %56 = dma.done [#allocation3], 512
    $region37: #{resnet_forward.1} parent=1 // pred_fallthru
      _
    // Predicated region
    $region38: #{resnet_forward.1} parent=1 // pred_check
      _
    $region39: #{resnet_forward.1} parent=1 // pred_check_branch
      %58 = sbr.rel (0) target = $region41
    $region40: #{resnet_forward.1} parent=1 // pred_region
      %60 = dma.done [#allocation5], 256
    $region41: #{resnet_forward.1} parent=1 // pred_fallthru
      _
    %v62 = vld [vmem:[%s0] sm:$0xff]
    %v63 = vpack.c.bf16 %v62, %v62
    %v64 = vld [vmem:[%s1] sm:$0x3]
    %v65 = vld [vmem:[%s2] sm:$0x1]
    %v67 = vperm.slane %v65, 0
    %vm69 = vcmask 31744
    %v71 = vsel %vm69, %v63, 0
    %vm73 = vcmask 1041408
    %v75 = vsel %vm73, %v64, 0
    %77 = vmatpush.bf16.msra.mxu0 0
    %78 = vmatpush.bf16.msra.mxu0 0
    %79 = vmatpush.bf16.msra.mxu0 0
    %80 = vmatpush.bf16.msra.mxu0 0
    %81 = vmatpush.bf16.msra.mxu0 0
    %82 = vmatpush.bf16.msra.mxu0 0
    %83 = vmatpush.bf16.msra.mxu0 0
    %84 = vmatpush.bf16.msra.mxu0 %v75
    %85 = vmatmul.bf16.gmra.mxu0 %v71
    %v86 = vpop.f32.mrf.mxu0
    %v87 = vadd.f32 %v67, %v86
    %v88 = vpop.f32.mrf.mxu0
    %89 = vdwg.mxu0
    %v90 = vtanh.pop %v87
    %v91 = vld [vmem:[%s4] sm:$0x3]
    %v92 = vld [vmem:[%s5] sm:$0x1]
    %v94 = vperm.slane %v92, 0
    %v97 = vsel %vm73, %v91, 0
    %99 = vmatpush.bf16.msra.mxu0 0
    %100 = vmatpush.bf16.msra.mxu0 0
    %101 = vmatpush.bf16.msra.mxu0 0
    %102 = vmatpush.bf16.msra.mxu0 0
    %103 = vmatpush.bf16.msra.mxu0 0
    %104 = vmatpush.bf16.msra.mxu0 0
    %105 = vmatpush.bf16.msra.mxu0 0
    %106 = vmatpush.bf16.msra.mxu0 %v97
    %107 = vmatmul.bf16.gmra.mxu0 %v71
    %v108 = vpop.f32.mrf.mxu0
    %v109 = vadd.f32 %v94, %v108
    %v110 = vpop.f32.mrf.mxu0
    %111 = vdwg.mxu0
    %v112 = vpack.c.bf16 %v90, %v90
    %v113 = vld [vmem:[#allocation2] sm:$0xf]
    %v114 = vld [vmem:[#allocation2 + $0x4] sm:$0xf]
    %v115 = vld [vmem:[#allocation2 + $0x8] sm:$0xf]
    %v116 = vld [vmem:[#allocation2 + $0xc] sm:$0xf]
    %v121 = vunpack.c.l.b16 %v113
    %v122 = vunpack.c.l.b16 %v114
    %v123 = vunpack.c.l.b16 %v115
    %v124 = vunpack.c.l.b16 %v116
    %v125 = vpack.c.b16 %v122, %v121
    %v126 = vpack.c.b16 %v124, %v123
    %vm129 = vcmask 261120
    %v131 = vsel %vm129, %v112, 0
    %133 = vmatpush.bf16.msra.mxu0 0
    %134 = vmatpush.bf16.msra.mxu0 0
    %135 = vmatpush.bf16.msra.mxu0 0
    %136 = vmatpush.bf16.msra.mxu0 0
    %137 = vmatpush.bf16.msra.mxu0 0
    %138 = vmatpush.bf16.msra.mxu0 0
    %139 = vmatpush.bf16.msra.mxu0 %v126
    %140 = vmatpush.bf16.msra.mxu0 %v125
    %141 = vmatmul.bf16.gmra.mxu0 %v131
    %v142 = vpop.f32.mrf.mxu0
    %v143 = vadd.f32 %v109, %v142
    %v144 = vpop.f32.mrf.mxu0
    %145 = vdwg.mxu0
    %v146 = vtanh.pop %v143
    %v147 = vadd.f32 %v146, %v90
    %v148 = vpack.c.bf16 %v147, %v147
    %s149 = scalar_lea.vmem [#allocation2], 16
    %v150 = vld [vmem:[%s149] sm:$0xf]
    %v151 = vld [vmem:[%s149 + $0x4] sm:$0xf]
    %v152 = vld [vmem:[%s149 + $0x8] sm:$0xf]
    %v153 = vld [vmem:[%s149 + $0xc] sm:$0xf]
    %v158 = vunpack.c.l.b16 %v150
    %v159 = vunpack.c.l.b16 %v151
    %v160 = vunpack.c.l.b16 %v152
    %v161 = vunpack.c.l.b16 %v153
    %v162 = vpack.c.b16 %v159, %v158
    %v163 = vpack.c.b16 %v161, %v160
    %167 = vrot.lane.b32.xlu0 %v109, 96
    %v168 = vpop.permute.xlu0 %167
    %v171 = vsel %vm129, %v148, 0
    %173 = vmatpush.bf16.msra.mxu0 0
    %174 = vmatpush.bf16.msra.mxu0 0
    %175 = vmatpush.bf16.msra.mxu0 0
    %176 = vmatpush.bf16.msra.mxu0 0
    %177 = vmatpush.bf16.msra.mxu0 0
    %178 = vmatpush.bf16.msra.mxu0 0
    %179 = vmatpush.bf16.msra.mxu0 %v163
    %180 = vmatpush.bf16.msra.mxu0 %v162
    %181 = vmatmul.bf16.gmra.mxu0 %v171
    %v182 = vpop.f32.mrf.mxu0
    %v183 = vadd.f32 %v168, %v182
    %v184 = vpop.f32.mrf.mxu0
    %185 = vdwg.mxu0
    %v186 = vtanh.pop %v183
    %v187 = vadd.f32 %v186, %v147
    %v188 = vpack.c.bf16 %v187, %v187
    %v189 = vld [vmem:[#allocation4] sm:$0xf]
    %v190 = vld [vmem:[#allocation4 + $0x4] sm:$0xf]
    %v191 = vld [vmem:[#allocation4 + $0x8] sm:$0xf]
    %v192 = vld [vmem:[#allocation4 + $0xc] sm:$0xf]
    %v193 = vld [vmem:[%s7] sm:$0x1]
    %v195 = vperm.slane %v193, 0
    %v201 = vunpack.c.l.b16 %v189
    %v202 = vunpack.c.l.b16 %v190
    %v203 = vunpack.c.l.b16 %v191
    %v204 = vunpack.c.l.b16 %v192
    %v205 = vpack.c.b16 %v202, %v201
    %v206 = vpack.c.b16 %v204, %v203
    %v210 = vsel %vm129, %v188, 0
    %212 = vmatpush.bf16.msra.mxu0 0
    %213 = vmatpush.bf16.msra.mxu0 0
    %214 = vmatpush.bf16.msra.mxu0 0
    %215 = vmatpush.bf16.msra.mxu0 0
    %216 = vmatpush.bf16.msra.mxu0 0
    %217 = vmatpush.bf16.msra.mxu0 0
    %218 = vmatpush.bf16.msra.mxu0 %v206
    %219 = vmatpush.bf16.msra.mxu0 %v205
    %220 = vmatmul.bf16.gmra.mxu0 %v210
    %v221 = vpop.f32.mrf.mxu0
    %v222 = vadd.f32 %v195, %v221
    %v223 = vpop.f32.mrf.mxu0
    %224 = vdwg.mxu0
    %225 = vst [vmem:[%s8] sm:$0xff] %v222
    // Predicated region
    $region42: #{resnet_forward.1} parent=1 // pred_check
      _
    $region43: #{resnet_forward.1} parent=1 // pred_check_branch
      %227 = sbr.rel (0) target = $region45
    $region44: #{resnet_forward.1} parent=1 // pred_region
      _
    $region45: #{resnet_forward.1} parent=1 // pred_fallthru
      _
    // Predicated region
    $region46: #{resnet_forward.1} parent=1 // pred_check
      _
    $region47: #{resnet_forward.1} parent=1 // pred_check_branch
      %229 = sbr.rel (0) target = $region49
    $region48: #{resnet_forward.1} parent=1 // pred_region
      _
    $region49: #{resnet_forward.1} parent=1 // pred_fallthru
      _
    %230 = vsyncpa [#allocation3], 1
    %231 = vsyncpa [#allocation5], 1

</llo_original>
